<compile_context>
chip_gen: v7x
topology: tpu7x:2x2x1
jax: 0.10.0
libtpu: 0.0.40
codegen_flags: <defaults>
</compile_context>

<pallas_src>
import functools

import jax
import jax.numpy as jnp
from jax import lax
from jax.experimental import pallas as pl
from jax.experimental.pallas import tpu as pltpu


# ----------------------------------------------------------------------------
# helpers
# ----------------------------------------------------------------------------
def _round_up(x, m):
    return ((x + m - 1) // m) * m


def _pick_batch_tiling(batch, want_tb):
    """Pick a batch tile (multiple of 8, <= want_tb) and the padded batch size."""
    bp = _round_up(batch, 8)
    tb = min(want_tb, bp)
    bp = _round_up(bp, tb)
    return tb, bp


def _pad_rows(x, bp, value=0.0):
    b = x.shape[0]
    if bp == b:
        return x
    pad = [(0, bp - b)] + [(0, 0)] * (x.ndim - 1)
    return jnp.pad(x, pad, constant_values=value)


def _pad_centers(cluster_centers):
    """Pad K to a multiple of 128 lanes; return transposed centers and |c|^2."""
    K, H = cluster_centers.shape
    KP = _round_up(K, 128)
    c_pad = jnp.pad(cluster_centers.astype(jnp.float32), ((0, KP - K), (0, 0)))
    c_t = c_pad.T                                     # (H, KP)  for MXU e @ c^T
    c_sq = jnp.sum(c_pad * c_pad, axis=1)[None, :]    # (1, KP)
    return c_t, c_sq, K, KP


# ----------------------------------------------------------------------------
# Kernel 1: masked mean pooling (get_embeddings body after the BERT call)
#   mean_output = sum_s(all_output * mask) / sum_s(mask)
# HBM-bandwidth bound -> small batch tile, explicit VMEM budget.
# ----------------------------------------------------------------------------
def _mean_pool_kernel(x_ref, m_ref, out_ref):
    x = x_ref[...]                                # (tb, S, H)
    m = m_ref[...]                                # (tb, S) float
    num = jnp.sum(x * m[:, :, None], axis=1)      # (tb, H)  sublane reduce over S
    den = jnp.sum(m, axis=1, keepdims=True)       # (tb, 1)
    out_ref[...] = (num / den).astype(out_ref.dtype)


def mean_pool(all_output, attention_mask, *, tb=8):
    B, S, H = all_output.shape
    tb, Bp = _pick_batch_tiling(B, tb)
    x = _pad_rows(all_output, Bp)
    # Padded rows get mask == 1 so the division stays finite (rows are sliced off).
    m = _pad_rows(attention_mask.astype(all_output.dtype), Bp, value=1.0)

    tile_bytes = (tb * S * H + tb * S + tb * H) * 4
    vmem_limit = int(min(max(4 * tile_bytes + (4 << 20), 16 << 20), 64 << 20))

    out = pl.pallas_call(
        _mean_pool_kernel,
        out_shape=jax.ShapeDtypeStruct((Bp, H), all_output.dtype),
        grid_spec=pltpu.PrefetchScalarGridSpec(
            num_scalar_prefetch=0,
            grid=(Bp // tb,),
            in_specs=[
                pl.BlockSpec((tb, S, H), lambda i: (i, 0, 0)),
                pl.BlockSpec((tb, S), lambda i: (i, 0)),
            ],
            out_specs=pl.BlockSpec((tb, H), lambda i: (i, 0)),
        ),
        compiler_params=pltpu.CompilerParams(
            dimension_semantics=("parallel",),
            vmem_limit_bytes=vmem_limit,
        ),
    )(x, m)
    return out[:B]


# ----------------------------------------------------------------------------
# Shared head bodies (traced inside kernels)
# ----------------------------------------------------------------------------
def _contrast_feat(e, w1, b1, w2, b2):
    """normalize(Linear2(ReLU(Linear1(e))), dim=1) — both matmuls on the MXU."""
    h = jnp.dot(e, w1, preferred_element_type=jnp.float32) + b1
    h = jnp.maximum(h, 0.0)
    y = jnp.dot(h, w2, preferred_element_type=jnp.float32) + b2
    nsq = jnp.sum(y * y, axis=1, keepdims=True)
    # rsqrt goes to the (otherwise idle) EUP slot; clamp matches torch's 1e-12 eps.
    return y * lax.rsqrt(jnp.maximum(nsq, 1e-24))


def _cluster_probs(e, c_t, c_sq, *, alpha, k_valid):
    """Student's-t assignment via ||e||^2 + ||c||^2 - 2 e@c^T (MXU matmul)."""
    e_sq = jnp.sum(e * e, axis=1, keepdims=True)                    # (tb, 1)
    cross = jnp.dot(e, c_t, preferred_element_type=jnp.float32)     # (tb, KP) MXU
    nsq = jnp.maximum(e_sq + c_sq - 2.0 * cross, 0.0)
    if alpha == 1.0:
        numer = 1.0 / (1.0 + nsq)        # skip the pointless ** 1.0 pow
    else:
        numer = (1.0 / (1.0 + nsq / alpha)) ** ((alpha + 1.0) / 2.0)
    # Zero out padded cluster columns before the lane reduce.
    valid = lax.broadcasted_iota(jnp.int32, numer.shape, 1) < k_valid
    numer = jnp.where(valid, numer, 0.0)
    denom = jnp.sum(numer, axis=1, keepdims=True)
    return numer * pl.reciprocal(denom)


# ----------------------------------------------------------------------------
# Kernel 2: contrast head + L2 normalize (contrast_logits)
# Kernel 3: Student's-t soft cluster assignment (get_cluster_prob)
# Kernel 4: fused heads — both outputs from one resident embedding tile
# ----------------------------------------------------------------------------
def _contrast_kernel(e_ref, w1_ref, b1_ref, w2_ref, b2_ref, feat_ref):
    feat_ref[...] = _contrast_feat(
        e_ref[...], w1_ref[...], b1_ref[...], w2_ref[...], b2_ref[...]
    ).astype(feat_ref.dtype)


def _cluster_kernel(e_ref, ct_ref, csq_ref, prob_ref, *, alpha, k_valid):
    prob_ref[...] = _cluster_probs(
        e_ref[...], ct_ref[...], csq_ref[...], alpha=alpha, k_valid=k_valid
    ).astype(prob_ref.dtype)


def _fused_heads_kernel(e_ref, w1_ref, b1_ref, w2_ref, b2_ref, ct_ref, csq_ref,
                        feat_ref, prob_ref, *, alpha, k_valid):
    e = e_ref[...]
    feat_ref[...] = _contrast_feat(
        e, w1_ref[...], b1_ref[...], w2_ref[...], b2_ref[...]
    ).astype(feat_ref.dtype)
    prob_ref[...] = _cluster_probs(
        e, ct_ref[...], csq_ref[...], alpha=alpha, k_valid=k_valid
    ).astype(prob_ref.dtype)


def contrast_head_normalize(embd, w1, b1, w2, b2, *, tb=128):
    B, H = embd.shape
    P = w2.shape[1]
    tb, Bp = _pick_batch_tiling(B, tb)
    e = _pad_rows(embd, Bp)
    out = pl.pallas_call(
        _contrast_kernel,
        out_shape=jax.ShapeDtypeStruct((Bp, P), jnp.float32),
        grid_spec=pltpu.PrefetchScalarGridSpec(
            num_scalar_prefetch=0,
            grid=(Bp // tb,),
            in_specs=[
                pl.BlockSpec((tb, H), lambda i: (i, 0)),
                pl.BlockSpec((H, H), lambda i: (0, 0)),
                pl.BlockSpec((1, H), lambda i: (0, 0)),
                pl.BlockSpec((H, P), lambda i: (0, 0)),
                pl.BlockSpec((1, P), lambda i: (0, 0)),
            ],
            out_specs=pl.BlockSpec((tb, P), lambda i: (i, 0)),
        ),
        compiler_params=pltpu.CompilerParams(dimension_semantics=("parallel",)),
    )(e, w1, b1, w2, b2)
    return out[:B]


def cluster_prob(embd, cluster_centers, *, alpha=1.0, tb=128):
    B, H = embd.shape
    c_t, c_sq, K, KP = _pad_centers(cluster_centers)
    tb, Bp = _pick_batch_tiling(B, tb)
    e = _pad_rows(embd, Bp)
    kern = functools.partial(_cluster_kernel, alpha=float(alpha), k_valid=K)
    out = pl.pallas_call(
        kern,
        out_shape=jax.ShapeDtypeStruct((Bp, KP), jnp.float32),
        grid_spec=pltpu.PrefetchScalarGridSpec(
            num_scalar_prefetch=0,
            grid=(Bp // tb,),
            in_specs=[
                pl.BlockSpec((tb, H), lambda i: (i, 0)),
                pl.BlockSpec((H, KP), lambda i: (0, 0)),
                pl.BlockSpec((1, KP), lambda i: (0, 0)),
            ],
            out_specs=pl.BlockSpec((tb, KP), lambda i: (i, 0)),
        ),
        compiler_params=pltpu.CompilerParams(dimension_semantics=("parallel",)),
    )(e, c_t, c_sq)
    return out[:B, :K]


def fused_heads(embd, w1, b1, w2, b2, cluster_centers, *, alpha=1.0, tb=128):
    """Contrast features AND cluster probabilities from one pass over embd."""
    B, H = embd.shape
    P = w2.shape[1]
    c_t, c_sq, K, KP = _pad_centers(cluster_centers)
    tb, Bp = _pick_batch_tiling(B, tb)
    e = _pad_rows(embd, Bp)
    kern = functools.partial(_fused_heads_kernel, alpha=float(alpha), k_valid=K)
    feat, prob = pl.pallas_call(
        kern,
        out_shape=(
            jax.ShapeDtypeStruct((Bp, P), jnp.float32),
            jax.ShapeDtypeStruct((Bp, KP), jnp.float32),
        ),
        grid_spec=pltpu.PrefetchScalarGridSpec(
            num_scalar_prefetch=0,
            grid=(Bp // tb,),
            in_specs=[
                pl.BlockSpec((tb, H), lambda i: (i, 0)),
                pl.BlockSpec((H, H), lambda i: (0, 0)),
                pl.BlockSpec((1, H), lambda i: (0, 0)),
                pl.BlockSpec((H, P), lambda i: (0, 0)),
                pl.BlockSpec((1, P), lambda i: (0, 0)),
                pl.BlockSpec((H, KP), lambda i: (0, 0)),
                pl.BlockSpec((1, KP), lambda i: (0, 0)),
            ],
            out_specs=(
                pl.BlockSpec((tb, P), lambda i: (i, 0)),
                pl.BlockSpec((tb, KP), lambda i: (i, 0)),
            ),
        ),
        compiler_params=pltpu.CompilerParams(dimension_semantics=("parallel",)),
    )(e, w1, b1, w2, b2, c_t, c_sq)
    return feat[:B], prob[:B, :K]


# ----------------------------------------------------------------------------
# Module wrapper (parameters + forward semantics)
# ----------------------------------------------------------------------------
class SentenceBertForClusterModelPallas:
    def __init__(self, emb_size, num_labels, cluster_centers, alpha=1.0, key=None):
        self.emb_size = emb_size
        self.num_labels = num_labels
        self.alpha = alpha
        self.eta = 1
        if key is None:
            key = jax.random.PRNGKey(0)
        k1, k2, k3, k4 = jax.random.split(key, 4)
        H, P = emb_size, 128
        # nn.Linear default init: U(-1/sqrt(fan_in), 1/sqrt(fan_in)); weights stored
        # transposed ([in, out]) for right-multiplication in the kernel.
        lim1 = 1.0 / (H ** 0.5)
        self.w1 = jax.random.uniform(k1, (H, H), jnp.float32, -lim1, lim1)
        self.b1 = jax.random.uniform(k2, (1, H), jnp.float32, -lim1, lim1)
        self.w2 = jax.random.uniform(k3, (H, P), jnp.float32, -lim1, lim1)
        self.b2 = jax.random.uniform(k4, (1, P), jnp.float32, -lim1, lim1)
        self.cluster_centers = jnp.asarray(cluster_centers, dtype=jnp.float32)

    def update(self, cluster_centers):
        self.cluster_centers = jnp.asarray(cluster_centers, dtype=jnp.float32)

    def get_embeddings(self, features):
        # features: dict with 'last_hidden_state' [B,S,H] (pre-computed BERT output)
        # and 'attention_mask' [B,S].
        return mean_pool(features["last_hidden_state"],
                         features["attention_mask"].astype(jnp.float32))

    def contrast_logits(self, embd1, embd2=None):
        if embd2 is None:
            return contrast_head_normalize(embd1, self.w1, self.b1, self.w2, self.b2)
        # Batch the two views through one kernel call (bigger MXU tile, one launch).
        both = jnp.concatenate([embd1, embd2], axis=0)
        feat = contrast_head_normalize(both, self.w1, self.b1, self.w2, self.b2)
        n = embd1.shape[0]
        return feat[:n], feat[n:]

    def get_cluster_prob(self, embeddings):
        return cluster_prob(embeddings, self.cluster_centers, alpha=self.alpha)

    def contrast_and_cluster(self, embeddings):
        """Fused path: both heads from one resident embedding tile (SCCL-style use)."""
        return fused_heads(embeddings, self.w1, self.b1, self.w2, self.b2,
                           self.cluster_centers, alpha=self.alpha)

    def forward(self, inputs=None, mode=None, pretrain=False):
        if not pretrain:
            if mode == "K-means":
                embd0 = self.get_embeddings(inputs[0])
                pooled_output = embd0
                return pooled_output
            if mode == "SCCL":
                # TODO(synk): InstanceLoss / KCL / target_distribution are external
                # classes not included in the provided source; SCCL loss not built.
                raise NotImplementedError("SCCL loss components not provided in source")


# ----------------------------------------------------------------------------
# Pure-JAX references for verification
# ----------------------------------------------------------------------------
def _ref_mean_pool(x, m):
    m3 = m.astype(x.dtype)[:, :, None]
    return jnp.sum(x * m3, axis=1) / jnp.sum(m3, axis=1)


def _ref_contrast(e, w1, b1, w2, b2):
    h = jnp.maximum(e @ w1 + b1, 0.0)
    y = h @ w2 + b2
    n = jnp.sqrt(jnp.sum(y * y, axis=1, keepdims=True))
    return y / jnp.maximum(n, 1e-12)


def _ref_cluster_prob(e, c, alpha):
    d = e[:, None, :] - c[None, :, :]
    ns = jnp.sum(d * d, axis=2)
    num = (1.0 / (1.0 + ns / alpha)) ** ((alpha + 1.0) / 2.0)
    return num / jnp.sum(num, axis=1, keepdims=True)


if __name__ == "__main__":
    B, S, H, K = 16, 8, 32, 4

    key = jax.random.PRNGKey(0)
    k_hid, k_mask, k_cent, k_par = jax.random.split(key, 4)

    # Synthetic "BERT last hidden state" and attention mask.
    hidden = jax.random.normal(k_hid, (B, S, H), dtype=jnp.float32)
    # Mask: first few tokens valid per example (always >= 1 valid token).
    lengths = 1 + (jax.random.randint(k_mask, (B,), 0, S))
    attn_mask = (jnp.arange(S)[None, :] < lengths[:, None]).astype(jnp.int32)
    cluster_centers = jax.random.normal(k_cent, (K, H), dtype=jnp.float32)

    model = SentenceBertForClusterModelPallas(
        emb_size=H, num_labels=K, cluster_centers=cluster_centers,
        alpha=1.0, key=k_par)

    features = {"last_hidden_state": hidden, "attention_mask": attn_mask}

    # forward, mode='K-means' -> pooled embeddings (Pallas kernel 1)
    pooled = model.forward(inputs=[features], mode="K-means")
    pooled = jax.block_until_ready(pooled)

    # Fused heads kernel (contrast feat + cluster probs from one pass).
    feat_f, probs_f = model.contrast_and_cluster(pooled)
    feat_f = jax.block_until_ready(feat_f)
    probs_f = jax.block_until_ready(probs_f)

    # Standalone head kernels (module API fidelity).
    feat1, feat2 = model.contrast_logits(pooled, pooled)
    probs = model.get_cluster_prob(pooled)
    feat1 = jax.block_until_ready(feat1)
    probs = jax.block_until_ready(probs)

    # Verify against pure-JAX references.
    ref_pool = _ref_mean_pool(hidden, attn_mask)
    ref_feat = _ref_contrast(ref_pool, model.w1, model.b1, model.w2, model.b2)
    ref_prob = _ref_cluster_prob(ref_pool, model.cluster_centers, 1.0)

    assert jnp.allclose(pooled, ref_pool, atol=1e-5, rtol=1e-5)
    assert jnp.allclose(feat_f, ref_feat, atol=1e-4, rtol=1e-4)
    assert jnp.allclose(probs_f, ref_prob, atol=1e-4, rtol=1e-4)
    assert jnp.allclose(feat1, ref_feat, atol=1e-4, rtol=1e-4)
    assert jnp.allclose(feat2, ref_feat, atol=1e-4, rtol=1e-4)
    assert jnp.allclose(probs, ref_prob, atol=1e-4, rtol=1e-4)

    print("KERNEL_OK")
</pallas_src>

<mosaic_0001>
module attributes {stable_mosaic.version = 11 : i64} {
  func.func @_mean_pool_kernel(%arg0: i32, %arg1: memref<8x8x32xf32, #tpu.memory_space<vmem>>, %arg2: memref<8x8xf32, #tpu.memory_space<vmem>>, %arg3: memref<8x32xf32, #tpu.memory_space<vmem>>) attributes {dimension_semantics = [#tpu.dimension_semantics<parallel>], iteration_bounds = array<i64: 2>, scalar_prefetch = 0 : i64, scratch_operands = 0 : i64, tpu.core_type = #tpu.core_type<tc>, window_params = [{transform_indices = @transform_0, window_bounds = array<i64: 8, 8, 32>}, {transform_indices = @transform_1, window_bounds = array<i64: 8, 8>}, {transform_indices = @transform_2, window_bounds = array<i64: 8, 32>}]} {
    %c0 = arith.constant 0 : index
    %c0_0 = arith.constant 0 : index
    %c0_1 = arith.constant 0 : index
    %0 = vector.load %arg1[%c0, %c0_0, %c0_1] : memref<8x8x32xf32, #tpu.memory_space<vmem>>, vector<8x8x32xf32>
    %c0_2 = arith.constant 0 : index
    %c0_3 = arith.constant 0 : index
    %1 = vector.load %arg2[%c0_2, %c0_3] : memref<8x8xf32, #tpu.memory_space<vmem>>, vector<8x8xf32>
    %2 = vector.shape_cast %1 : vector<8x8xf32> to vector<8x8x1xf32>
    %3 = vector.broadcast %2 : vector<8x8x1xf32> to vector<8x8x32xf32>
    %4 = arith.mulf %0, %3 : vector<8x8x32xf32>
    %cst = arith.constant dense<0.000000e+00> : vector<8x32xf32>
    %5 = vector.multi_reduction <add>, %4, %cst [1] : vector<8x8x32xf32> to vector<8x32xf32>
    %cst_4 = arith.constant dense<0.000000e+00> : vector<8xf32>
    %6 = vector.multi_reduction <add>, %1, %cst_4 [1] : vector<8x8xf32> to vector<8xf32>
    %7 = vector.shape_cast %6 : vector<8xf32> to vector<8x1xf32>
    %8 = vector.broadcast %7 : vector<8x1xf32> to vector<8x32xf32>
    %9 = arith.divf %5, %8 : vector<8x32xf32>
    %c0_5 = arith.constant 0 : index
    %c0_6 = arith.constant 0 : index
    %10 = vector.load %arg3[%c0_5, %c0_6] : memref<8x32xf32, #tpu.memory_space<vmem>>, vector<8x32xf32>
    tpu.vector_store %arg3[%c0_5, %c0_6], %9 {strides = array<i32>} : memref<8x32xf32, #tpu.memory_space<vmem>>, vector<8x32xf32>,
    return
  }
  func.func @transform_0(%arg0: i32) -> (i32, i32, i32) {
    %c0_i32 = arith.constant 0 : i32
    %c0_i32_0 = arith.constant 0 : i32
    %c0_i32_1 = arith.constant 0 : i32
    return %arg0, %c0_i32, %c0_i32_0 : i32, i32, i32
  }
  func.func @transform_1(%arg0: i32) -> (i32, i32) {
    %c0_i32 = arith.constant 0 : i32
    %c0_i32_0 = arith.constant 0 : i32
    return %arg0, %c0_i32 : i32, i32
  }
  func.func @transform_2(%arg0: i32) -> (i32, i32) {
    %c0_i32 = arith.constant 0 : i32
    %c0_i32_0 = arith.constant 0 : i32
    return %arg0, %c0_i32 : i32, i32
  }
}

</mosaic_0001>

<llo_original>
// kernel: tpu_custom_call.1
$region0: #{tpu_custom_call.1}
  #allocation0 [shape = 'u32[]', space=smem, size = 0x4, offset = 0x4, fixed_abs, tag = 'smem constant byte address 0x4 - core index']
  #allocation1 [shape = 'u32[144,128]{1,0:T(1,128)}', space=vmem, size = 0x12000, scoped, tag = 'internal scratch']
  %s0 = inlined_call_operand.hbm [shape: f32[16,8,32], index: 0, kind: input, shape index: {}]
  %s1 = inlined_call_operand.vmem [shape: f32[16,8], index: 1, kind: input, shape index: {}]
  %s2 = inlined_call_operand.hbm [shape: f32[16,32], index: 2, kind: output, shape index: {}]
  %s3 = sld [smem:[#allocation0]]
  $region45: #{tpu_custom_call.1} parent=0
    _
  %s5 = ssub.s32 1, %s3
  %s6 = scalar_select 0, %s5, %s3
  $region1: #{tpu_custom_call.1} parent=0
    #allocation2 [shape = 'u8[65536]{0}', space=vmem, size = 0x10000, scoped, tag = 'input window, operand 0']
    #allocation3 [shape = 's32[2]{0}', space=sflag, size = 0x8, scoped, tag = 'scoped memory for tpu_custom_call.1']
    #allocation4 [shape = 's32[2]{0}', space=sflag, size = 0x8, scoped, tag = 'scoped memory for tpu_custom_call.1']
    #allocation5 [shape = 'u8[8192]{0}', space=vmem, size = 0x2000, scoped, tag = 'output window, operand 0']
    %7 = vsyncpa [#allocation3], 0
    %s8 = scalar_lea.sflag [#allocation3], 1
    %9 = vsyncpa %s8, 0
    %10 = vsyncpa [#allocation4], 0
    %s11 = scalar_lea.sflag [#allocation4], 1
    %12 = vsyncpa %s11, 0
    loop: start=0, step=1, limit=4
    $region2: #{tpu_custom_call.1} parent=1 // loop_pre_header
      _
    $region3: #{tpu_custom_call.1} parent=1 // loop_header
      %s14 = sphi 0, %s18
      %p15 = scmp.ge.s32.totalorder %s14, 4
      %s24 = sphi 0, %s26
      %s27 = sphi 0, %s24
      %s28 = sphi 0, %s27
      %s44 = sphi 0, %s28
      %s50 = sphi 0, %s52
      %s53 = sphi 0, %s50
      %s54 = sphi 0, %s53
      %s70 = sphi 0, %s54
      %s76 = sphi 0, %s78
      %s79 = sphi 0, %s76
      %s80 = sphi 0, %s79
      %s96 = sphi 0, %s80
    $region4: #{tpu_custom_call.1} parent=1 // loop_header_branch
      %17 = sbr.rel (%p15) target = $region8
    $region5: #{tpu_custom_call.1} parent=1 // loop_body
      %s19 = ssub.s32 %s14, 1
      %s20 = ssub.s32 %s14, 2
      %s21 = sadd.s32 %s14, 1
      %s22 = ssub.s32 %s14, %s21
      %p23 = scmp.eq.s32.totalorder %s22, 0
      %s25 = sadd.s32 %s24, 1
      %s26 = scalar_select %p23, %s24, %s25
      %p29 = pneg %p23
      %p30 = scmp.eq.s32.totalorder %s14, 1
      %p31 = por %p29, %p30
      %p32 = scmp.ne.s32.totalorder %s24, %s27
      %p33 = scmp.eq.s32.totalorder %s14, 0
      %p34 = por %p32, %p33
      %p35 = scmp.ne.s32.totalorder %s24, %s27
      %p36 = scmp.eq.s32.totalorder %s19, 1
      %p37 = por %p35, %p36
      %p38 = scmp.ne.s32.totalorder %s27, %s28
      %p39 = scmp.eq.s32.totalorder %s19, 0
      %p40 = por %p38, %p39
      %p41 = scmp.ne.s32.totalorder %s27, %s28
      %p42 = scmp.eq.s32.totalorder %s20, 1
      %p43 = por %p41, %p42
      %p45 = scmp.ne.s32.totalorder %s28, %s44
      %p46 = scmp.eq.s32.totalorder %s20, 0
      %p47 = por %p45, %p46
      %s48 = ssub.s32 %s14, %s21
      %p49 = scmp.eq.s32.totalorder %s48, 0
      %s51 = sadd.s32 %s50, 1
      %s52 = scalar_select %p49, %s50, %s51
      %p55 = pneg %p49
      %p56 = scmp.eq.s32.totalorder %s14, 1
      %p57 = por %p55, %p56
      %p58 = scmp.ne.s32.totalorder %s50, %s53
      %p59 = scmp.eq.s32.totalorder %s14, 0
      %p60 = por %p58, %p59
      %p61 = scmp.ne.s32.totalorder %s50, %s53
      %p62 = scmp.eq.s32.totalorder %s19, 1
      %p63 = por %p61, %p62
      %p64 = scmp.ne.s32.totalorder %s53, %s54
      %p65 = scmp.eq.s32.totalorder %s19, 0
      %p66 = por %p64, %p65
      %p67 = scmp.ne.s32.totalorder %s53, %s54
      %p68 = scmp.eq.s32.totalorder %s20, 1
      %p69 = por %p67, %p68
      %p71 = scmp.ne.s32.totalorder %s54, %s70
      %p72 = scmp.eq.s32.totalorder %s20, 0
      %p73 = por %p71, %p72
      %s74 = ssub.s32 %s14, %s21
      %p75 = scmp.eq.s32.totalorder %s74, 0
      %s77 = sadd.s32 %s76, 1
      %s78 = scalar_select %p75, %s76, %s77
      %p81 = pneg %p75
      %p82 = scmp.eq.s32.totalorder %s14, 1
      %p83 = por %p81, %p82
      %p84 = scmp.ne.s32.totalorder %s76, %s79
      %p85 = scmp.eq.s32.totalorder %s14, 0
      %p86 = por %p84, %p85
      %p87 = scmp.ne.s32.totalorder %s76, %s79
      %p88 = scmp.eq.s32.totalorder %s19, 1
      %p89 = por %p87, %p88
      %p90 = scmp.ne.s32.totalorder %s79, %s80
      %p91 = scmp.eq.s32.totalorder %s19, 0
      %p92 = por %p90, %p91
      %p93 = scmp.ne.s32.totalorder %s79, %s80
      %p94 = scmp.eq.s32.totalorder %s20, 1
      %p95 = por %p93, %p94
      %p97 = scmp.ne.s32.totalorder %s80, %s96
      %p98 = scmp.eq.s32.totalorder %s20, 0
      %p99 = por %p97, %p98
      %p100 = scmp.le.s32.totalorder 1, %s14
      %p101 = scmp.lt.s32.totalorder %s14, 3
      %p102 = pnand %p100, %p101
      %p103 = pneg %p102
      // Predicated region
      $region9: #{tpu_custom_call.1} parent=5 // pred_check
        _
      $region10: #{tpu_custom_call.1} parent=5 // pred_check_branch
        %105 = sbr.rel (%p102) target = $region12
      $region11: #{tpu_custom_call.1} parent=5 // pred_region
        %s106 = ssub.s32 %s14, 1
      $region12: #{tpu_custom_call.1} parent=5 // pred_fallthru
        _
      %p107 = scmp.lt.s32.totalorder %s14, 2
      // Predicated region
      $region13: #{tpu_custom_call.1} parent=5 // pred_check
        %p108 = pneg %p107
      $region14: #{tpu_custom_call.1} parent=5 // pred_check_branch
        %110 = sbr.rel (%p108) target = $region16
      $region15: #{tpu_custom_call.1} parent=5 // pred_region
        // Predicated region
        $region17: #{tpu_custom_call.1} parent=15 // pred_check
          %p111 = pneg %p34
        $region18: #{tpu_custom_call.1} parent=15 // pred_check_branch
          %113 = sbr.rel (%p111) target = $region20
        $region19: #{tpu_custom_call.1} parent=15 // pred_region
          %s114 = sand.u32 %s24, 1
          %s115 = scalar_lea.sflag [#allocation3], %s114
          %s116 = sand.u32 %s24, 1
          %s117 = smul.addr %s116, 64
          %s118 = scalar_lea.vmem [#allocation2], %s117
          %s119 = smul.u32 8, %s14
          %s121 = ssub.s32 1024, 1024
          %122 = vsyncadd %s115, %s121
          %s123 = smul.addr %s119, 128
          %s124 = scalar_lea.hbm %s0, %s123
          %s125 = sshll.u32 %s118, 4
          %s126 = int_to_ptr.vmem [resolvable:$true] %s125
          %131 = dma.hbm_to_vmem [thread:$0]  %s124, 1024, %s126, %s115, 128, 128, 8
        $region20: #{tpu_custom_call.1} parent=15 // pred_fallthru
          _
        // Predicated region
        $region21: #{tpu_custom_call.1} parent=15 // pred_check
          %p132 = pneg %p60
        $region22: #{tpu_custom_call.1} parent=15 // pred_check_branch
          %134 = sbr.rel (%p132) target = $region24
        $region23: #{tpu_custom_call.1} parent=15 // pred_region
          %p135 = scmp.lt.s32.totalorder %s14, 1
          %s136 = scalar_select %p135, %s14, 1
          %s137 = smul.addr %s136, 8
          %s138 = scalar_lea.vmem %s1, %s137
        $region24: #{tpu_custom_call.1} parent=15 // pred_fallthru
          _
      $region16: #{tpu_custom_call.1} parent=5 // pred_fallthru
        _
      %p139 = scmp.le.s32.totalorder 1, %s14
      %p140 = scmp.lt.s32.totalorder %s14, 3
      %p141 = pnand %p139, %p140
      %p142 = pneg %p141
      // Predicated region
      $region25: #{tpu_custom_call.1} parent=5 // pred_check
        _
      $region26: #{tpu_custom_call.1} parent=5 // pred_check_branch
        %144 = sbr.rel (%p141) target = $region28
      $region27: #{tpu_custom_call.1} parent=5 // pred_region
        %s145 = ssub.s32 %s14, 1
        %s146 = sand.u32 %s27, 1
        %s147 = scalar_lea.sflag [#allocation3], %s146
        %s148 = sand.u32 %s27, 1
        %s149 = smul.addr %s148, 64
        %s150 = scalar_lea.vmem [#allocation2], %s149
        // Predicated region
        $region29: #{tpu_custom_call.1} parent=27 // pred_check
          %p151 = pneg %p40
        $region30: #{tpu_custom_call.1} parent=27 // pred_check_branch
          %153 = sbr.rel (%p151) target = $region32
        $region31: #{tpu_custom_call.1} parent=27 // pred_region
          %154 = dma.done %s147, 1024
        $region32: #{tpu_custom_call.1} parent=27 // pred_fallthru
          _
        %s155 = sand.u32 %s27, 1
        %s156 = scalar_lea.sflag [#allocation3], %s155
        %s157 = sand.u32 %s27, 1
        %s158 = smul.addr %s157, 64
        %s159 = scalar_lea.vmem [#allocation2], %s158
        %p160 = pneg %p40
        %p161 = pneg %p37
        %p162 = scmp.lt.s32.totalorder %s19, 1
        %s163 = scalar_select %p162, %s19, 1
        %s164 = smul.addr %s163, 8
        %s165 = scalar_lea.vmem %s1, %s164
        %p166 = pneg %p66
        %p167 = pneg %p63
        %p168 = pneg %p92
        %p169 = pneg %p89
        %s170 = sand.u32 %s79, 1
        %s171 = scalar_lea.sflag [#allocation4], %s170
        %s172 = sand.u32 %s79, 1
        %s173 = smul.addr %s172, 8
        %s174 = scalar_lea.vmem [#allocation5], %s173
        %s175 = smul.u32 8, %s19
        %p176 = scmp.lt.s32.totalorder %s19, 1
        %s177 = scalar_select %p176, %s19, 1
        %s178 = smul.addr %s177, 8
        %s179 = scalar_lea.vmem %s1, %s178
        %v180 = vld [vmem:[%s150] sm:$0xff]
        %v181 = vld [vmem:[%s150 + $0x8] sm:$0xff]
        %v182 = vld [vmem:[%s150 + $0x10] sm:$0xff]
        %v183 = vld [vmem:[%s150 + $0x18] sm:$0xff]
        %v184 = vld [vmem:[%s150 + $0x20] sm:$0xff]
        %v185 = vld [vmem:[%s150 + $0x28] sm:$0xff]
        %v186 = vld [vmem:[%s150 + $0x30] sm:$0xff]
        %v187 = vld [vmem:[%s150 + $0x38] sm:$0xff]
        %v188 = vld [vmem:[%s179] sm:$0xff]
        %v189 = vlaneseq
        %v190 = vshrl.u32 %v189, 7
        %v191 = vsub.s32 0, %v190
        %v192 = vrot.slane %v188, %v191
        %194 = vbcast.lane.b32.xlu0 %v192, 256
        %v195 = vpop.permute.xlu0 %194
        %v196 = vlaneseq
        %v197 = vshrl.u32 %v196, 7
        %v198 = vsub.s32 1, %v197
        %v199 = vrot.slane %v188, %v198
        %201 = vbcast.lane.b32.xlu0 %v199, 256
        %v202 = vpop.permute.xlu0 %201
        %v203 = vlaneseq
        %v204 = vshrl.u32 %v203, 7
        %v205 = vsub.s32 2, %v204
        %v206 = vrot.slane %v188, %v205
        %208 = vbcast.lane.b32.xlu0 %v206, 256
        %v209 = vpop.permute.xlu0 %208
        %v210 = vlaneseq
        %v211 = vshrl.u32 %v210, 7
        %v212 = vsub.s32 3, %v211
        %v213 = vrot.slane %v188, %v212
        %215 = vbcast.lane.b32.xlu0 %v213, 256
        %v216 = vpop.permute.xlu0 %215
        %v217 = vlaneseq
        %v218 = vshrl.u32 %v217, 7
        %v219 = vsub.s32 4, %v218
        %v220 = vrot.slane %v188, %v219
        %222 = vbcast.lane.b32.xlu0 %v220, 256
        %v223 = vpop.permute.xlu0 %222
        %v224 = vlaneseq
        %v225 = vshrl.u32 %v224, 7
        %v226 = vsub.s32 5, %v225
        %v227 = vrot.slane %v188, %v226
        %229 = vbcast.lane.b32.xlu0 %v227, 256
        %v230 = vpop.permute.xlu0 %229
        %v231 = vlaneseq
        %v232 = vshrl.u32 %v231, 7
        %v233 = vsub.s32 6, %v232
        %v234 = vrot.slane %v188, %v233
        %236 = vbcast.lane.b32.xlu0 %v234, 256
        %v237 = vpop.permute.xlu0 %236
        %v238 = vlaneseq
        %v239 = vshrl.u32 %v238, 7
        %v240 = vsub.s32 7, %v239
        %v241 = vrot.slane %v188, %v240
        %243 = vbcast.lane.b32.xlu0 %v241, 256
        %v244 = vpop.permute.xlu0 %243
        %v245 = vmul.f32 %v180, %v195
        %v246 = vmul.f32 %v181, %v202
        %v247 = vmul.f32 %v182, %v209
        %v248 = vmul.f32 %v183, %v216
        %v249 = vmul.f32 %v184, %v223
        %v250 = vmul.f32 %v185, %v230
        %v251 = vmul.f32 %v186, %v237
        %v252 = vmul.f32 %v187, %v244
        %vm253 = vcmask 261120
        %v254 = vsel %vm253, %v245, 0.0
        %v255 = vrot.slane %v254, 4
        %v256 = vadd.f32 %v254, %v255
        %v257 = vrot.slane %v256, 2
        %v258 = vadd.f32 %v256, %v257
        %v259 = vrot.slane %v258, 1
        %v260 = vadd.f32 %v258, %v259
        %v261 = vsel %vm253, %v246, 0.0
        %v262 = vrot.slane %v261, 4
        %v263 = vadd.f32 %v261, %v262
        %v264 = vrot.slane %v263, 2
        %v265 = vadd.f32 %v263, %v264
        %v266 = vrot.slane %v265, 1
        %v267 = vadd.f32 %v265, %v266
        %v268 = vsel %vm253, %v247, 0.0
        %v269 = vrot.slane %v268, 4
        %v270 = vadd.f32 %v268, %v269
        %v271 = vrot.slane %v270, 2
        %v272 = vadd.f32 %v270, %v271
        %v273 = vrot.slane %v272, 1
        %v274 = vadd.f32 %v272, %v273
        %v275 = vsel %vm253, %v248, 0.0
        %v276 = vrot.slane %v275, 4
        %v277 = vadd.f32 %v275, %v276
        %v278 = vrot.slane %v277, 2
        %v279 = vadd.f32 %v277, %v278
        %v280 = vrot.slane %v279, 1
        %v281 = vadd.f32 %v279, %v280
        %v282 = vsel %vm253, %v249, 0.0
        %v283 = vrot.slane %v282, 4
        %v284 = vadd.f32 %v282, %v283
        %v285 = vrot.slane %v284, 2
        %v286 = vadd.f32 %v284, %v285
        %v287 = vrot.slane %v286, 1
        %v288 = vadd.f32 %v286, %v287
        %v289 = vsel %vm253, %v250, 0.0
        %v290 = vrot.slane %v289, 4
        %v291 = vadd.f32 %v289, %v290
        %v292 = vrot.slane %v291, 2
        %v293 = vadd.f32 %v291, %v292
        %v294 = vrot.slane %v293, 1
        %v295 = vadd.f32 %v293, %v294
        %v296 = vsel %vm253, %v251, 0.0
        %v297 = vrot.slane %v296, 4
        %v298 = vadd.f32 %v296, %v297
        %v299 = vrot.slane %v298, 2
        %v300 = vadd.f32 %v298, %v299
        %v301 = vrot.slane %v300, 1
        %v302 = vadd.f32 %v300, %v301
        %v303 = vsel %vm253, %v252, 0.0
        %v304 = vrot.slane %v303, 4
        %v305 = vadd.f32 %v303, %v304
        %v306 = vrot.slane %v305, 2
        %v307 = vadd.f32 %v305, %v306
        %v308 = vrot.slane %v307, 1
        %v309 = vadd.f32 %v307, %v308
        %vm310 = vcmask 64512
        %v311 = vsel %vm310, %v188, 0.0
        %312 = vadd.xlane.f32.xlu0 %v311
        %v313 = vpop.xlane.xlu0 %312
        %v315 = vrot.slane %v313, 1
        %v316 = vrot.slane %v313, 2
        %v317 = vrot.slane %v313, 3
        %v318 = vrot.slane %v313, 4
        %v319 = vrot.slane %v313, 5
        %v320 = vrot.slane %v313, 6
        %v321 = vrot.slane %v313, 7
        %v330 = vrcp.pop %v313
        %v331 = vmul.f32 %v260, %v330
        %v332 = vrcp.pop %v315
        %v333 = vmul.f32 %v267, %v332
        %v334 = vrcp.pop %v316
        %v335 = vmul.f32 %v274, %v334
        %v336 = vrcp.pop %v317
        %v337 = vmul.f32 %v281, %v336
        %v338 = vrcp.pop %v318
        %v339 = vmul.f32 %v288, %v338
        %v340 = vrcp.pop %v319
        %v341 = vmul.f32 %v295, %v340
        %v342 = vrcp.pop %v320
        %v343 = vmul.f32 %v302, %v342
        %v344 = vrcp.pop %v321
        %v345 = vmul.f32 %v309, %v344
        %v354 = vrot.slane %v333, 7
        %vm355 = vcmask 1041409
        %v356 = vsel %vm355, %v354, %v331
        %v357 = vrot.slane %v335, 6
        %vm358 = vcmask 1042434
        %v359 = vsel %vm358, %v357, %v356
        %v360 = vrot.slane %v337, 5
        %vm361 = vcmask 1043459
        %v362 = vsel %vm361, %v360, %v359
        %v363 = vrot.slane %v339, 4
        %vm364 = vcmask 1044484
        %v365 = vsel %vm364, %v363, %v362
        %v366 = vrot.slane %v341, 3
        %vm367 = vcmask 1045509
        %v368 = vsel %vm367, %v366, %v365
        %v369 = vrot.slane %v343, 2
        %vm370 = vcmask 1046534
        %v371 = vsel %vm370, %v369, %v368
        %v372 = vrot.slane %v345, 1
        %vm373 = vcmask 1047559
        %v374 = vsel %vm373, %v372, %v371
        %376 = vst.msk [vmem:[%s174] sm:$0xff] %vm253, %v374
        %s377 = sand.u32 %s79, 1
        %s378 = scalar_lea.sflag [#allocation4], %s377
        %s379 = sand.u32 %s79, 1
        %s380 = smul.addr %s379, 8
        %s381 = scalar_lea.vmem [#allocation5], %s380
        // Predicated region
        $region33: #{tpu_custom_call.1} parent=27 // pred_check
          %p382 = pneg %p89
        $region34: #{tpu_custom_call.1} parent=27 // pred_check_branch
          %384 = sbr.rel (%p382) target = $region36
        $region35: #{tpu_custom_call.1} parent=27 // pred_region
          %s386 = ssub.s32 128, 128
          %387 = vsyncadd %s378, %s386
          %s388 = smul.addr %s19, 128
          %s389 = scalar_lea.hbm %s2, %s388
          %s391 = sshll.u32 %s381, 4
          %s392 = int_to_ptr.vmem [resolvable:$true] %s391
          %394 = dma.vmem_to_hbm [thread:$0]  %s392, 128, %s389, %s378
        $region36: #{tpu_custom_call.1} parent=27 // pred_fallthru
          _
      $region28: #{tpu_custom_call.1} parent=5 // pred_fallthru
        _
      %p395 = scmp.le.s32.totalorder 2, %s14
      // Predicated region
      $region37: #{tpu_custom_call.1} parent=5 // pred_check
        %p396 = pneg %p395
      $region38: #{tpu_custom_call.1} parent=5 // pred_check_branch
        %398 = sbr.rel (%p396) target = $region40
      $region39: #{tpu_custom_call.1} parent=5 // pred_region
        %s399 = ssub.s32 %s14, 2
        // Predicated region
        $region41: #{tpu_custom_call.1} parent=39 // pred_check
          %p400 = pneg %p95
        $region42: #{tpu_custom_call.1} parent=39 // pred_check_branch
          %402 = sbr.rel (%p400) target = $region44
        $region43: #{tpu_custom_call.1} parent=39 // pred_region
          %s403 = sand.u32 %s80, 1
          %s404 = scalar_lea.sflag [#allocation4], %s403
          %s405 = sand.u32 %s80, 1
          %s406 = smul.addr %s405, 8
          %s407 = scalar_lea.vmem [#allocation5], %s406
          %408 = dma.done %s404, 128
        $region44: #{tpu_custom_call.1} parent=39 // pred_fallthru
          _
      $region40: #{tpu_custom_call.1} parent=5 // pred_fallthru
        _
    $region6: #{tpu_custom_call.1} parent=1 // loop_footer
      %s18 = sadd.s32 1, %s14
    $region7: #{tpu_custom_call.1} parent=1 // loop_footer_branch
      %13 = sbr.rel target = $region3
    $region8: #{tpu_custom_call.1} parent=1 // loop_exit
      _
    %409 = vsyncpa [#allocation3], 1
    %s410 = scalar_lea.sflag [#allocation3], 1
    %411 = vsyncpa %s410, 1
    %412 = vsyncpa [#allocation4], 1
    %s413 = scalar_lea.sflag [#allocation4], 1
    %414 = vsyncpa %s413, 1

</llo_original>
